<compile_context>
chip_gen: v7x
topology: tpu7x:2x2x1
jax: 0.10.0
libtpu: 0.0.40
codegen_flags: <defaults>
</compile_context>

<pallas_src>
import functools

import jax
import jax.numpy as jnp
from jax.experimental import pallas as pl
from jax.experimental.pallas import tpu as pltpu


# Target bytes of embedding rows moved/produced per grid step. ~512 KiB keeps
# v5e/v6e at the HBM roofline and is a reasonable compromise for v7x (which
# prefers ~1 MiB payloads but has only 64 MiB of VMEM).
_TARGET_STEP_BYTES = 512 * 1024

# VMEM budget for keeping the table resident (counted double-buffered). 24 MiB
# fits comfortably inside the scoped-VMEM limits of v5e/v6e/v7x.
_RESIDENT_TABLE_BUDGET = 24 * 1024 * 1024


def _embed_resident_kernel(ids_ref, table_ref, out_ref, *, scale, tb):
    """Gather TB token rows from a VMEM-resident table, scale, store."""
    # ids_ref  : (T_pad,) int32 in SMEM (scalar prefetch).
    # table_ref: (V, D) table, resident in VMEM (fetched once).
    # out_ref  : (TB, D) output tile for this token block.
    base = pl.program_id(0) * tb

    @pl.loop(0, tb)
    def _(j):
        tok = ids_ref[base + j]
        row = table_ref[pl.ds(tok, 1), :].astype(jnp.float32) * scale
        out_ref[pl.ds(j, 1), :] = row.astype(out_ref.dtype)


def _embed_dma_gather_kernel(ids_ref, table_hbm_ref, out_ref, buf_ref, sem_ref,
                             *, scale, tb):
    """Manual DMA gather of TB table rows HBM -> VMEM, then scale + store."""
    # ids_ref      : (T_pad,) int32 in SMEM (scalar prefetch).
    # table_hbm_ref: (V, D) table left in HBM (memory_space=pl.ANY).
    # out_ref      : (TB, D) output tile.
    # buf_ref      : (TB, D) VMEM staging buffer.
    # sem_ref      : single DMA semaphore (all row copies signal it).
    base = pl.program_id(0) * tb

    # Issue TB independent row copies; they are all in flight concurrently so
    # per-row HBM latency is amortized across the whole token block.
    @pl.loop(0, tb)
    def _(j):
        tok = ids_ref[base + j]
        pltpu.make_async_copy(table_hbm_ref.at[tok], buf_ref.at[j],
                              sem_ref).start()

    # Every row copy signals the same semaphore; wait for the aggregate byte
    # count with one descriptor covering the whole staging buffer.
    pltpu.make_async_copy(buf_ref, buf_ref, sem_ref).wait()

    # One vectorized, lane/sublane-dense scale + store (multiply kept in f32).
    out_ref[...] = (buf_ref[...].astype(jnp.float32) * scale).astype(out_ref.dtype)


def embedder_forward(tokens, table, *,
                     resident_table_budget_bytes=_RESIDENT_TABLE_BUDGET,
                     target_step_bytes=_TARGET_STEP_BYTES):
    """tokens: (B, S) int, table: (V, D) float -> (B, S, D) float."""
    B, S = tokens.shape
    V, D = table.shape
    T = B * S
    dtype = table.dtype
    itemsize = jnp.dtype(dtype).itemsize

    # Same f32 constant as jnp.sqrt(jnp.float32(D)) so results match reference.
    scale = float(jnp.sqrt(jnp.asarray(D, jnp.float32)))

    # --- Token-block size: multiple of 8 (f32 sublanes), ~target_step_bytes
    # of row data per step, never (much) larger than the token count. ---
    row_bytes = D * itemsize
    tb = max(1, target_step_bytes // row_bytes)
    tb = int(max(8, min(512, (tb // 8) * 8)))
    t_ceil8 = ((T + 7) // 8) * 8
    tb = min(tb, t_ceil8)
    tb = max(8, (tb // 8) * 8)

    T_pad = ((T + tb - 1) // tb) * tb
    n_blocks = T_pad // tb

    # Token ids -> SMEM via scalar prefetch. Clamp so a bad id can never drive
    # an out-of-bounds row access / DMA.
    # TODO(synk): PyTorch nn.Embedding raises on out-of-range ids; here we clamp.
    ids = jnp.clip(tokens.reshape(T).astype(jnp.int32), 0, V - 1)
    if T_pad != T:
        ids = jnp.concatenate([ids, jnp.zeros((T_pad - T,), jnp.int32)])

    out_tile_bytes = tb * D * itemsize
    table_bytes = V * D * itemsize

    resident_vmem = 2 * table_bytes + 2 * out_tile_bytes  # table may be 2x-buffered
    use_resident = resident_vmem <= resident_table_budget_bytes

    if use_resident:
        kernel = functools.partial(_embed_resident_kernel, scale=scale, tb=tb)
        grid_spec = pltpu.PrefetchScalarGridSpec(
            num_scalar_prefetch=1,
            grid=(n_blocks,),
            in_specs=[
                # Constant index_map -> table DMA'd HBM->VMEM once, resident.
                pl.BlockSpec((V, D), lambda i, ids: (0, 0)),
            ],
            out_specs=pl.BlockSpec((tb, D), lambda i, ids: (i, 0)),
        )
        vmem_needed = resident_vmem
    else:
        kernel = functools.partial(_embed_dma_gather_kernel, scale=scale, tb=tb)
        grid_spec = pltpu.PrefetchScalarGridSpec(
            num_scalar_prefetch=1,
            grid=(n_blocks,),
            in_specs=[
                # Table stays in HBM; rows are gathered with manual DMAs.
                pl.BlockSpec(memory_space=pl.ANY),
            ],
            out_specs=pl.BlockSpec((tb, D), lambda i, ids: (i, 0)),
            scratch_shapes=[
                pltpu.VMEM((tb, D), dtype),
                pltpu.SemaphoreType.DMA(()),
            ],
        )
        vmem_needed = out_tile_bytes + 2 * out_tile_bytes  # staging + dbl-buffered out

    # Explicit VMEM budget: 2x the computed need, capped at 32 MiB so it is
    # safe on v7x's 64 MiB physical VMEM as well as v5e/v6e.
    vmem_limit = int(min(32 * 1024 * 1024,
                         max(8 * 1024 * 1024, 2 * vmem_needed)))

    out = pl.pallas_call(
        kernel,
        out_shape=jax.ShapeDtypeStruct((T_pad, D), dtype),
        grid_spec=grid_spec,
        compiler_params=pltpu.CompilerParams(
            # Each token block is independent and self-contained -> let v7x's
            # two TensorCores split the grid (no-op on v5e/v6e).
            dimension_semantics=("parallel",),
            vmem_limit_bytes=vmem_limit,
        ),
    )(ids, table)

    return out[:T].reshape(B, S, D)


if __name__ == "__main__":
    # Small, deterministic configuration consistent with the module.
    vocab_size = 64
    d_model = 128
    batch, seq = 2, 8

    key = jax.random.PRNGKey(0)
    k_tok, k_emb = jax.random.split(key)

    tokens = jax.random.randint(k_tok, (batch, seq), 0, vocab_size, dtype=jnp.int32)
    # Deterministic init of nn.Embedding weight (N(0,1), like PyTorch default).
    table = jax.random.normal(k_emb, (vocab_size, d_model), dtype=jnp.float32)

    # Reference: plain JAX gather * sqrt(d_model).
    ref = jnp.take(table, tokens, axis=0) * jnp.sqrt(jnp.float32(d_model))

    # Path 1: VMEM-resident table fast path (taken for this small vocab).
    out_res = embedder_forward(tokens, table)
    out_res = jax.block_until_ready(out_res)
    assert out_res.shape == (batch, seq, d_model)
    assert jnp.allclose(out_res, ref, atol=1e-5, rtol=1e-5)

    # Path 2: force the large-vocab manual DMA-gather path on the same inputs.
    out_dma = embedder_forward(tokens, table, resident_table_budget_bytes=0)
    out_dma = jax.block_until_ready(out_dma)
    assert out_dma.shape == (batch, seq, d_model)
    assert jnp.allclose(out_dma, ref, atol=1e-5, rtol=1e-5)

    print("KERNEL_OK")
</pallas_src>

<mosaic_0001>
module attributes {stable_mosaic.version = 11 : i64} {
  func.func @_embed_resident_kernel(%arg0: i32, %arg1: memref<16xi32, #tpu.memory_space<smem>>, %arg2: memref<64x128xf32, #tpu.memory_space<vmem>>, %arg3: memref<16x128xf32, #tpu.memory_space<vmem>>) attributes {dimension_semantics = [#tpu.dimension_semantics<parallel>], iteration_bounds = array<i64: 1>, scalar_prefetch = 1 : i64, scratch_operands = 0 : i64, tpu.core_type = #tpu.core_type<tc>, window_params = [{pipeline_mode = #tpu.pipeline_mode<synchronous>, transform_indices = @transform_0, window_bounds = array<i64: 64, 128>}, {transform_indices = @transform_1, window_bounds = array<i64: 16, 128>}]} {
    %c16_i32 = arith.constant 16 : i32
    %0 = arith.muli %arg0, %c16_i32 : i32
    %c0_i32 = arith.constant 0 : i32
    %c16_i32_0 = arith.constant 16 : i32
    %1 = arith.addi %c0_i32, %c16_i32_0 : i32
    %c1_i32 = arith.constant 1 : i32
    scf.for %arg4 = %c0_i32 to %1 step %c1_i32  : i32 {
      %c1_i32_2 = arith.constant 1 : i32
      %2 = arith.muli %arg4, %c1_i32_2 : i32
      %c0_i32_3 = arith.constant 0 : i32
      %3 = arith.addi %c0_i32_3, %2 : i32
      %4 = arith.addi %0, %3 : i32
      %5 = arith.index_cast %4 : i32 to index
      %6 = memref.load %arg1[%5] : memref<16xi32, #tpu.memory_space<smem>>
      %7 = arith.index_cast %6 : i32 to index
      %c0 = arith.constant 0 : index
      %8 = vector.load %arg2[%7, %c0] : memref<64x128xf32, #tpu.memory_space<vmem>>, vector<1x128xf32>
      %cst = arith.constant 11.3137083 : f32
      %9 = vector.broadcast %cst : f32 to vector<1x128xf32>
      %10 = arith.mulf %8, %9 : vector<1x128xf32>
      %11 = arith.index_cast %3 : i32 to index
      %c0_4 = arith.constant 0 : index
      %12 = vector.load %arg3[%11, %c0_4] : memref<16x128xf32, #tpu.memory_space<vmem>>, vector<1x128xf32>
      tpu.vector_store %arg3[%11, %c0_4], %10 {strides = array<i32>} : memref<16x128xf32, #tpu.memory_space<vmem>>, vector<1x128xf32>,
    }
    %c16_i32_1 = arith.constant 16 : i32
    return
  }
  func.func @transform_0(%arg0: i32, %arg1: memref<16xi32, #tpu.memory_space<smem>>) -> (i32, i32) {
    %c0_i32 = arith.constant 0 : i32
    %c0_i32_0 = arith.constant 0 : i32
    %c0_i32_1 = arith.constant 0 : i32
    return %c0_i32, %c0_i32_0 : i32, i32
  }
  func.func @transform_1(%arg0: i32, %arg1: memref<16xi32, #tpu.memory_space<smem>>) -> (i32, i32) {
    %c0_i32 = arith.constant 0 : i32
    %c0_i32_0 = arith.constant 0 : i32
    return %arg0, %c0_i32 : i32, i32
  }
}

</mosaic_0001>

<llo_original>
// kernel: tpu_custom_call.1
$region0: #{tpu_custom_call.1}
  #allocation0 [shape = 'u32[]', space=smem, size = 0x4, offset = 0x4, fixed_abs, tag = 'smem constant byte address 0x4 - core index']
  #allocation1 [shape = 'u32[144,128]{1,0:T(1,128)}', space=vmem, size = 0x12000, scoped, tag = 'internal scratch']
  #allocation2 [shape = 's32[1]{0}', space=sflag, size = 0x4, scoped, tag = 'scoped memory for tpu_custom_call.1']
  #allocation3 [shape = 'u8[512]{0}', space=smem, size = 0x200, scoped, tag = 'prefetched SMEM operand 0']
  %s0 = inlined_call_operand.hbm [shape: s32[16], index: 0, kind: input, shape index: {}]
  %s1 = inlined_call_operand.hbm [shape: f32[64,128], index: 1, kind: input, shape index: {}]
  %s2 = inlined_call_operand.hbm [shape: f32[16,128], index: 2, kind: output, shape index: {}]
  %s3 = sld [smem:[#allocation0]]
  $region25: #{tpu_custom_call.1} parent=0
    _
  %s5 = ssub.s32 1, %s3
  %s6 = scalar_select 0, %s5, %s3
  %8 = dma.hbm_to_smem %s0, 16, [#allocation3], [#allocation2]
  %9 = dma.done [#allocation2], 16
  %10 = sfence
  $region1: #{tpu_custom_call.1} parent=0
    #allocation4 [shape = 'u8[32768]{0}', space=vmem, size = 0x8000, scoped, tag = 'input window, operand 1, single buffered']
    #allocation5 [shape = 's32[1]{0}', space=sflag, size = 0x4, scoped, tag = 'scoped memory for tpu_custom_call.1']
    #allocation6 [shape = 's32[1]{0}', space=sflag, size = 0x4, scoped, tag = 'scoped memory for tpu_custom_call.1']
    #allocation7 [shape = 'u8[8192]{0}', space=vmem, size = 0x2000, scoped, tag = 'output window, operand 0, single buffered']
    %11 = vsyncpa [#allocation5], 0
    %12 = vsyncpa [#allocation6], 0
    // Predicated region
    $region2: #{tpu_custom_call.1} parent=1 // pred_check
      _
    $region3: #{tpu_custom_call.1} parent=1 // pred_check_branch
      %14 = sbr.rel (0) target = $region5
    $region4: #{tpu_custom_call.1} parent=1 // pred_region
      %s16 = ssub.s32 1024, 1024
      %17 = vsyncadd [#allocation5], %s16
      %s18 = sshll.u32 [#allocation4], 4
      %s19 = int_to_ptr.vmem [resolvable:$true] %s18
      %24 = dma.hbm_to_vmem [thread:$0]  %s1, 1024, %s19, [#allocation5], 128, 128, 8
    $region5: #{tpu_custom_call.1} parent=1 // pred_fallthru
      _
    // Predicated region
    $region6: #{tpu_custom_call.1} parent=1 // pred_check
      _
    $region7: #{tpu_custom_call.1} parent=1 // pred_check_branch
      %26 = sbr.rel (0) target = $region9
    $region8: #{tpu_custom_call.1} parent=1 // pred_region
      %27 = dma.done [#allocation5], 1024
    $region9: #{tpu_custom_call.1} parent=1 // pred_fallthru
      _
    %s28 = smul.u32 0, 16
    loop: start=0, step=1, limit=16
    $region10: #{tpu_custom_call.1} parent=1 // loop_pre_header
      _
    $region11: #{tpu_custom_call.1} parent=1 // loop_header
      %s30 = sphi 0, %s34
      %p31 = scmp.ge.s32.totalorder %s30, 16
    $region12: #{tpu_custom_call.1} parent=1 // loop_header_branch
      %33 = sbr.rel (%p31) target = $region16
    $region13: #{tpu_custom_call.1} parent=1 // loop_body
      %s35 = sadd.s32 %s28, %s30
      %s36 = sld [smem:[#allocation3 + %s35]]
      %s37 = scalar_lea.vmem [#allocation4], %s36
      %v38 = vld [vmem:[%s37] sm:$0x1]
      %v39 = vmul.f32 %v38, 11.313708
      %s40 = scalar_lea.vmem [#allocation7], %s30
      %41 = vst [vmem:[%s40] sm:$0x1] %v39
    $region14: #{tpu_custom_call.1} parent=1 // loop_footer
      %s34 = sadd.s32 1, %s30
    $region15: #{tpu_custom_call.1} parent=1 // loop_footer_branch
      %29 = sbr.rel target = $region11
    $region16: #{tpu_custom_call.1} parent=1 // loop_exit
      _
    // Predicated region
    $region17: #{tpu_custom_call.1} parent=1 // pred_check
      _
    $region18: #{tpu_custom_call.1} parent=1 // pred_check_branch
      %43 = sbr.rel (0) target = $region20
    $region19: #{tpu_custom_call.1} parent=1 // pred_region
      %s45 = ssub.s32 256, 256
      %46 = vsyncadd [#allocation6], %s45
      %s47 = sshll.u32 [#allocation7], 4
      %s48 = int_to_ptr.vmem [resolvable:$true] %s47
      %53 = dma.vmem_to_hbm [thread:$0]  %s48, 256, %s2, [#allocation6], 128, 128, 8
    $region20: #{tpu_custom_call.1} parent=1 // pred_fallthru
      _
    // Predicated region
    $region21: #{tpu_custom_call.1} parent=1 // pred_check
      _
    $region22: #{tpu_custom_call.1} parent=1 // pred_check_branch
      %55 = sbr.rel (0) target = $region24
    $region23: #{tpu_custom_call.1} parent=1 // pred_region
      %56 = dma.done [#allocation6], 256
    $region24: #{tpu_custom_call.1} parent=1 // pred_fallthru
      _
    %57 = vsyncpa [#allocation5], 1
    %58 = vsyncpa [#allocation6], 1

</llo_original>
